<compile_context>
chip_gen: v5e
topology: v5e:2x2
jax: 0.10.0
libtpu: 0.0.40
codegen_flags: <defaults>
</compile_context>

<pallas_src>
import math
import functools

import jax
import jax.numpy as jnp
from jax.experimental import pallas as pl
from jax.experimental.pallas import tpu as pltpu


def _round_up(x, m):
    return (x + m - 1) // m * m


def _mora_kernel(x_ref, gate_ref, res_ref, a_ref, b_ref, expand_ref, o_ref,
                 hg_ref, *, scaling):
    # Compute the gated low-rank projection once per token tile (j == 0) and
    # keep it resident in VMEM scratch across all output-column tiles.
    @pl.when(pl.program_id(1) == 0)
    def _():
        # h = x @ A^T  (f32 accumulation on the MXU)
        h = jnp.dot(x_ref[...], a_ref[...], preferred_element_type=jnp.float32)
        # gate (tm, E_pad) @ one-hot expand (E_pad, re_p): replaces
        # view(..., E, rank) * gate[..., None] with a lane-aligned matmul.
        gate_exp = jnp.dot(gate_ref[...], expand_ref[...],
                           preferred_element_type=jnp.float32)
        hg_ref[...] = (h * gate_exp).astype(hg_ref.dtype)

    # y = (gated h) @ B^T, scaled by an f32 scalar (VPU op, hidden under DMA).
    y = jnp.dot(hg_ref[...], b_ref[...], preferred_element_type=jnp.float32)
    # Match PyTorch exactly: cast the LoRA term to residual dtype, THEN add.
    o_ref[...] = (y * scaling).astype(o_ref.dtype) + res_ref[...]


def prepare_mora_weights(mora_a, mora_b, *, num_experts, rank, dtype=None,
                         lane_pad=128):
    """One-time weight prep (per layer, NOT per call):
      * transpose to MXU-friendly layouts,
      * zero-pad the rank*num_experts axis and the expert axis to lane
        multiples (exact: padded rows/cols contribute zero),
      * build the exact 0/1 gate-expansion one-hot (lossless under bf16).
    Pass dtype=jnp.bfloat16 for production: native MXU rate + half the HBM
    traffic; f32 accumulation is kept inside the kernel."""
    re = rank * num_experts
    in_f = mora_a.shape[1]
    out_f = mora_b.shape[0]
    assert mora_a.shape == (re, in_f)
    assert mora_b.shape == (out_f, re)

    re_p = _round_up(re, lane_pad)
    e_pad = _round_up(num_experts, lane_pad)

    a_t = jnp.pad(mora_a.T, ((0, 0), (0, re_p - re)))      # (in_f, re_p)
    b_t = jnp.pad(mora_b.T, ((0, re_p - re), (0, 0)))      # (re_p, out_f)

    # expand[e, j] = 1.0 if j // rank == e and j < re else 0.0
    hit = (jnp.arange(re_p)[None, :] // rank) == jnp.arange(e_pad)[:, None]
    valid = (jnp.arange(re_p) < re)[None, :]
    expand = (hit & valid).astype(jnp.float32)             # (e_pad, re_p)

    if dtype is not None:
        a_t = a_t.astype(dtype)
        b_t = b_t.astype(dtype)
        expand = expand.astype(dtype)
    else:
        expand = expand.astype(mora_a.dtype)
    return a_t, b_t, expand


def _maybe_single_buffered_spec(shape, index_map, single_buffer):
    """BlockSpec that opts out of double-buffering for grid-invariant inputs
    (reclaims VMEM); falls back gracefully if pipeline_mode is unsupported."""
    if single_buffer:
        try:
            return pl.BlockSpec(shape, index_map, pipeline_mode=pl.Buffered(1))
        except Exception:  # older jax: no pipeline_mode kwarg / Buffered
            pass
    return pl.BlockSpec(shape, index_map)


def mora_forward(hidden_states, gate, residual, a_t, b_t, expand, *, scaling,
                 tm=512, tn=None, vmem_limit_bytes=None):
    """hidden_states: (..., in_f); gate: (..., num_experts); residual: (..., out_f).
    a_t / b_t / expand come from prepare_mora_weights()."""
    in_f = hidden_states.shape[-1]
    out_f = residual.shape[-1]
    num_experts = gate.shape[-1]
    e_pad, re_p = expand.shape
    assert a_t.shape == (in_f, re_p)
    assert b_t.shape == (re_p, out_f)
    out_dtype = residual.dtype

    batch_shape = hidden_states.shape[:-1]
    T = int(math.prod(batch_shape)) if batch_shape else 1

    x2 = hidden_states.reshape(T, in_f)
    g2 = gate.reshape(T, num_experts)
    r2 = residual.reshape(T, out_f)

    # Pad only the (tiny) gate stream so it is lane-dense; everything else is
    # streamed unpadded (ragged edges handled by Pallas boundary handling).
    if e_pad != num_experts:
        g2 = jnp.pad(g2, ((0, 0), (0, e_pad - num_experts)))

    # Output-column tile: full width unless out_features is very large.
    if tn is None:
        tn = out_f if (out_f <= 4096 or out_f % 128 != 0) else 4096
    nj = pl.cdiv(out_f, tn)

    # Token tile: large for throughput; keep >=2 token tiles when possible so
    # both v7x TensorCores get work; full-extent block for tiny T.
    tm = _round_up(max(int(tm), 16), 16)
    if T <= 16:
        tm_eff = T
    else:
        tm_eff = min(tm, max(16, _round_up((T + 1) // 2, 16)))

    # Derive the VMEM budget from actual tile sizes (not a blanket constant).
    def _vmem_needed(tm_e):
        act = 2 * tm_e * (in_f * x2.dtype.itemsize
                          + e_pad * g2.dtype.itemsize
                          + 2 * tn * r2.dtype.itemsize)      # residual + out
        wgt = (a_t.size * a_t.dtype.itemsize
               + expand.size * expand.dtype.itemsize
               + (1 if nj == 1 else 2) * re_p * tn * b_t.dtype.itemsize)
        scr = tm_e * re_p * b_t.dtype.itemsize
        return act + wgt + scr

    try:
        phys_vmem = int(pltpu.get_tpu_info().vmem_capacity_bytes)
        if phys_vmem <= 0:
            raise ValueError
    except Exception:
        phys_vmem = 64 * 1024 * 1024       # conservative (v7x per-core VMEM)
    budget = min(phys_vmem - 16 * 1024 * 1024, 100 * 1024 * 1024)
    while tm_eff > 64 and _vmem_needed(tm_eff) > budget:
        tm_eff = max(64, _round_up(tm_eff // 2, 16))
    if vmem_limit_bytes is None:
        vmem_limit_bytes = min(budget, max(32 * 1024 * 1024,
                                           int(_vmem_needed(tm_eff) * 1.3) + (8 << 20)))

    grid = (pl.cdiv(T, tm_eff), nj)

    # Advisory cost estimate so XLA schedules surrounding ops correctly.
    flops = 2 * T * re_p * (in_f + e_pad + out_f)
    bytes_accessed = (x2.size * x2.dtype.itemsize
                      + g2.size * g2.dtype.itemsize
                      + 2 * r2.size * r2.dtype.itemsize     # residual in + out
                      + a_t.size * a_t.dtype.itemsize
                      + b_t.size * b_t.dtype.itemsize
                      + expand.size * expand.dtype.itemsize)
    cost = pl.CostEstimate(flops=int(flops), transcendentals=0,
                           bytes_accessed=int(bytes_accessed))

    kernel = functools.partial(_mora_kernel, scaling=float(scaling))

    out = pl.pallas_call(
        kernel,
        out_shape=jax.ShapeDtypeStruct((T, out_f), out_dtype),
        grid_spec=pltpu.PrefetchScalarGridSpec(
            num_scalar_prefetch=0,
            grid=grid,
            in_specs=[
                pl.BlockSpec((tm_eff, in_f), lambda i, j: (i, 0)),
                pl.BlockSpec((tm_eff, e_pad), lambda i, j: (i, 0)),
                pl.BlockSpec((tm_eff, tn), lambda i, j: (i, j)),
                # grid-invariant weights: fetched once, single-buffered
                _maybe_single_buffered_spec((in_f, re_p), lambda i, j: (0, 0), True),
                _maybe_single_buffered_spec((re_p, tn), lambda i, j: (0, j), nj == 1),
                _maybe_single_buffered_spec((e_pad, re_p), lambda i, j: (0, 0), True),
            ],
            out_specs=pl.BlockSpec((tm_eff, tn), lambda i, j: (i, j)),
            scratch_shapes=[pltpu.VMEM((tm_eff, re_p), b_t.dtype)],
        ),
        compiler_params=pltpu.CompilerParams(
            dimension_semantics=("parallel", "arbitrary"),
            vmem_limit_bytes=int(vmem_limit_bytes),
        ),
        cost_estimate=cost,
    )(x2, g2, r2, a_t, b_t, expand)

    return out.reshape(batch_shape + (out_f,))


if __name__ == "__main__":
    # Small shapes consistent with the module's forward.
    B, S = 2, 8
    in_features, out_features = 32, 32
    num_experts, rank = 4, 8
    lora_alpha = 16
    scaling = lora_alpha / math.sqrt(rank)

    key = jax.random.PRNGKey(0)
    k1, k2, k3, k4, k5 = jax.random.split(key, 5)
    x = jax.random.normal(k1, (B, S, in_features), jnp.float32)
    gate = jax.nn.softmax(jax.random.normal(k2, (B, S, num_experts), jnp.float32), axis=-1)
    residual = jax.random.normal(k3, (B, S, out_features), jnp.float32)

    # kaiming_uniform_(a=sqrt(5)) on mora_a -> U(-1/sqrt(fan_in), 1/sqrt(fan_in))
    bound = 1.0 / math.sqrt(in_features)
    mora_a = jax.random.uniform(k4, (rank * num_experts, in_features), jnp.float32,
                                minval=-bound, maxval=bound)
    # reset_parameters() zeroes mora_b (output would equal residual); use small
    # deterministic random values so the full kernel path is actually exercised.
    mora_b = jax.random.normal(k5, (out_features, rank * num_experts), jnp.float32) * 0.02

    # f32 path (matches the module default dtype)
    a_t, b_t, expand = prepare_mora_weights(
        mora_a, mora_b, num_experts=num_experts, rank=rank)
    out = mora_forward(x, gate, residual, a_t, b_t, expand, scaling=scaling)
    out = jax.block_until_ready(out)

    # pure-JAX reference of the exact PyTorch semantics
    h = x @ mora_a.T
    h = h.reshape(B, S, num_experts, rank) * gate[..., None]
    h = h.reshape(B, S, num_experts * rank)
    ref = (h @ mora_b.T) * scaling + residual
    assert out.shape == ref.shape and out.dtype == residual.dtype
    assert jnp.allclose(out, ref, atol=1e-2, rtol=1e-2), "f32 mismatch vs reference"

    # bf16 datapath smoke test (production config: bf16 stream, f32 accumulation)
    a16, b16, e16 = prepare_mora_weights(
        mora_a, mora_b, num_experts=num_experts, rank=rank, dtype=jnp.bfloat16)
    out16 = mora_forward(x.astype(jnp.bfloat16), gate.astype(jnp.bfloat16),
                         residual.astype(jnp.bfloat16), a16, b16, e16, scaling=scaling)
    out16 = jax.block_until_ready(out16)
    assert out16.shape == ref.shape and out16.dtype == jnp.bfloat16
    out16_f32 = out16.astype(jnp.float32)
    assert bool(jnp.all(jnp.isfinite(out16_f32)))
    assert jnp.allclose(out16_f32, ref, atol=1e-1, rtol=1e-1), "bf16 mismatch vs reference"

    print("KERNEL_OK")
</pallas_src>

<mosaic_0001>
module attributes {stable_mosaic.version = 11 : i64} {
  func.func @_mora_kernel(%arg0: i32, %arg1: i32, %arg2: memref<16x32xf32, #tpu.memory_space<vmem>>, %arg3: memref<16x128xf32, #tpu.memory_space<vmem>>, %arg4: memref<16x32xf32, #tpu.memory_space<vmem>>, %arg5: memref<32x128xf32, #tpu.memory_space<vmem>>, %arg6: memref<128x32xf32, #tpu.memory_space<vmem>>, %arg7: memref<128x128xf32, #tpu.memory_space<vmem>>, %arg8: memref<16x32xf32, #tpu.memory_space<vmem>>, %arg9: memref<16x128xf32, #tpu.memory_space<vmem>>) attributes {dimension_semantics = [#tpu.dimension_semantics<parallel>, #tpu.dimension_semantics<arbitrary>], iteration_bounds = array<i64: 1, 1>, scalar_prefetch = 0 : i64, scratch_operands = 1 : i64, tpu.core_type = #tpu.core_type<tc>, window_params = [{transform_indices = @transform_0, window_bounds = array<i64: 16, 32>}, {transform_indices = @transform_1, window_bounds = array<i64: 16, 128>}, {transform_indices = @transform_2, window_bounds = array<i64: 16, 32>}, {pipeline_mode = #tpu.pipeline_mode<synchronous>, transform_indices = @transform_3, window_bounds = array<i64: 32, 128>}, {pipeline_mode = #tpu.pipeline_mode<synchronous>, transform_indices = @transform_4, window_bounds = array<i64: 128, 32>}, {pipeline_mode = #tpu.pipeline_mode<synchronous>, transform_indices = @transform_5, window_bounds = array<i64: 128, 128>}, {transform_indices = @transform_6, window_bounds = array<i64: 16, 32>}]} {
    %c0_i32 = arith.constant 0 : i32
    %0 = arith.cmpi eq, %arg1, %c0_i32 : i32
    %1 = arith.extui %0 : i1 to i32
    %c0_i32_0 = arith.constant 0 : i32
    %2 = arith.cmpi ne, %1, %c0_i32_0 : i32
    scf.if %2 {
      %c0_9 = arith.constant 0 : index
      %c0_10 = arith.constant 0 : index
      %11 = vector.load %arg2[%c0_9, %c0_10] : memref<16x32xf32, #tpu.memory_space<vmem>>, vector<16x32xf32>
      %c0_11 = arith.constant 0 : index
      %c0_12 = arith.constant 0 : index
      %12 = vector.load %arg5[%c0_11, %c0_12] : memref<32x128xf32, #tpu.memory_space<vmem>>, vector<32x128xf32>
      %cst_13 = arith.constant dense<0.000000e+00> : vector<16x128xf32>
      %13 = tpu.matmul %11, %12, %cst_13 {dimension_numbers = #tpu.dot_dimension_numbers<[1], [0], [0], [1], [0, 0, 1, 1], [], []>} : vector<16x32xf32>, vector<32x128xf32>, vector<16x128xf32> -> vector<16x128xf32>
      %c0_14 = arith.constant 0 : index
      %c0_15 = arith.constant 0 : index
      %14 = vector.load %arg3[%c0_14, %c0_15] : memref<16x128xf32, #tpu.memory_space<vmem>>, vector<16x128xf32>
      %c0_16 = arith.constant 0 : index
      %c0_17 = arith.constant 0 : index
      %15 = vector.load %arg7[%c0_16, %c0_17] : memref<128x128xf32, #tpu.memory_space<vmem>>, vector<128x128xf32>
      %cst_18 = arith.constant dense<0.000000e+00> : vector<16x128xf32>
      %16 = tpu.matmul %14, %15, %cst_18 {dimension_numbers = #tpu.dot_dimension_numbers<[1], [0], [0], [1], [0, 0, 1, 1], [], []>} : vector<16x128xf32>, vector<128x128xf32>, vector<16x128xf32> -> vector<16x128xf32>
      %17 = arith.mulf %13, %16 : vector<16x128xf32>
      %c0_19 = arith.constant 0 : index
      %c0_20 = arith.constant 0 : index
      %18 = vector.load %arg9[%c0_19, %c0_20] : memref<16x128xf32, #tpu.memory_space<vmem>>, vector<16x128xf32>
      tpu.vector_store %arg9[%c0_19, %c0_20], %17 {strides = array<i32>} : memref<16x128xf32, #tpu.memory_space<vmem>>, vector<16x128xf32>,
    } else {
    }
    %c0 = arith.constant 0 : index
    %c0_1 = arith.constant 0 : index
    %3 = vector.load %arg9[%c0, %c0_1] : memref<16x128xf32, #tpu.memory_space<vmem>>, vector<16x128xf32>
    %c0_2 = arith.constant 0 : index
    %c0_3 = arith.constant 0 : index
    %4 = vector.load %arg6[%c0_2, %c0_3] : memref<128x32xf32, #tpu.memory_space<vmem>>, vector<128x32xf32>
    %cst = arith.constant dense<0.000000e+00> : vector<16x32xf32>
    %5 = tpu.matmul %3, %4, %cst {dimension_numbers = #tpu.dot_dimension_numbers<[1], [0], [0], [1], [0, 0, 1, 1], [], []>} : vector<16x128xf32>, vector<128x32xf32>, vector<16x32xf32> -> vector<16x32xf32>
    %cst_4 = arith.constant 5.65685415 : f32
    %6 = vector.broadcast %cst_4 : f32 to vector<16x32xf32>
    %7 = arith.mulf %5, %6 : vector<16x32xf32>
    %c0_5 = arith.constant 0 : index
    %c0_6 = arith.constant 0 : index
    %8 = vector.load %arg4[%c0_5, %c0_6] : memref<16x32xf32, #tpu.memory_space<vmem>>, vector<16x32xf32>
    %9 = arith.addf %7, %8 : vector<16x32xf32>
    %c0_7 = arith.constant 0 : index
    %c0_8 = arith.constant 0 : index
    %10 = vector.load %arg8[%c0_7, %c0_8] : memref<16x32xf32, #tpu.memory_space<vmem>>, vector<16x32xf32>
    tpu.vector_store %arg8[%c0_7, %c0_8], %9 {strides = array<i32>} : memref<16x32xf32, #tpu.memory_space<vmem>>, vector<16x32xf32>,
    return
  }
  func.func @transform_0(%arg0: i32, %arg1: i32) -> (i32, i32) {
    %c0_i32 = arith.constant 0 : i32
    %c0_i32_0 = arith.constant 0 : i32
    return %arg0, %c0_i32 : i32, i32
  }
  func.func @transform_1(%arg0: i32, %arg1: i32) -> (i32, i32) {
    %c0_i32 = arith.constant 0 : i32
    %c0_i32_0 = arith.constant 0 : i32
    return %arg0, %c0_i32 : i32, i32
  }
  func.func @transform_2(%arg0: i32, %arg1: i32) -> (i32, i32) {
    %c0_i32 = arith.constant 0 : i32
    return %arg0, %arg1 : i32, i32
  }
  func.func @transform_3(%arg0: i32, %arg1: i32) -> (i32, i32) {
    %c0_i32 = arith.constant 0 : i32
    %c0_i32_0 = arith.constant 0 : i32
    %c0_i32_1 = arith.constant 0 : i32
    return %c0_i32, %c0_i32_0 : i32, i32
  }
  func.func @transform_4(%arg0: i32, %arg1: i32) -> (i32, i32) {
    %c0_i32 = arith.constant 0 : i32
    %c0_i32_0 = arith.constant 0 : i32
    return %c0_i32, %arg1 : i32, i32
  }
  func.func @transform_5(%arg0: i32, %arg1: i32) -> (i32, i32) {
    %c0_i32 = arith.constant 0 : i32
    %c0_i32_0 = arith.constant 0 : i32
    %c0_i32_1 = arith.constant 0 : i32
    return %c0_i32, %c0_i32_0 : i32, i32
  }
  func.func @transform_6(%arg0: i32, %arg1: i32) -> (i32, i32) {
    %c0_i32 = arith.constant 0 : i32
    return %arg0, %arg1 : i32, i32
  }
}

</mosaic_0001>

<llo_original>
// kernel: tpu_custom_call.1
$region0: #{tpu_custom_call.1}
  #allocation0 [shape = 'u32[]', space=smem, size = 0x4, offset = 0x4, fixed_abs, tag = 'smem constant byte address 0x4 - core index']
  #allocation1 [shape = 'u32[72,128]{1,0:T(1,128)}', space=vmem, size = 0x9000, scoped, tag = 'internal scratch']
  #allocation2 [shape = 'f32[16,128]{1,0:T(8,128)}', space=vmem, size = 0x2000, scoped, tag = 'scratch operand']
  %s0 = inlined_call_operand.hbm [shape: f32[16,32], index: 0, kind: input, shape index: {}]
  %s1 = inlined_call_operand.hbm [shape: f32[16,128], index: 1, kind: input, shape index: {}]
  %s2 = inlined_call_operand.hbm [shape: f32[16,32], index: 2, kind: input, shape index: {}]
  %s3 = inlined_call_operand.vmem [shape: f32[32,128], index: 3, kind: input, shape index: {}]
  %s4 = inlined_call_operand.vmem [shape: f32[128,32], index: 4, kind: input, shape index: {}]
  %s5 = inlined_call_operand.vmem [shape: f32[128,128], index: 5, kind: input, shape index: {}]
  %s6 = inlined_call_operand.hbm [shape: f32[16,32], index: 6, kind: output, shape index: {}]
  %s7 = sld [smem:[#allocation0]]
  $region50: #{tpu_custom_call.1} parent=0
    _
  %s9 = ssub.s32 1, %s7
  %s10 = scalar_select 0, %s9, %s7
  $region1: #{tpu_custom_call.1} parent=0
    #allocation3 [shape = 'u8[8192]{0}', space=vmem, size = 0x2000, scoped, tag = 'input window, operand 0, single buffered']
    #allocation4 [shape = 's32[1]{0}', space=sflag, size = 0x4, scoped, tag = 'scoped memory for tpu_custom_call.1']
    #allocation5 [shape = 's32[1]{0}', space=sflag, size = 0x4, scoped, tag = 'scoped memory for tpu_custom_call.1']
    #allocation6 [shape = 'u8[8192]{0}', space=vmem, size = 0x2000, scoped, tag = 'input window, operand 1, single buffered']
    #allocation7 [shape = 's32[1]{0}', space=sflag, size = 0x4, scoped, tag = 'scoped memory for tpu_custom_call.1']
    #allocation8 [shape = 'u8[8192]{0}', space=vmem, size = 0x2000, scoped, tag = 'input window, operand 2, single buffered']
    #allocation9 [shape = 'u8[8192]{0}', space=vmem, size = 0x2000, scoped, tag = 'output window, operand 0, single buffered']
    %11 = vsyncpa [#allocation4], 0
    %12 = vsyncpa [#allocation7], 0
    %13 = vsyncpa [#allocation5], 0
    // Predicated region
    $region2: #{tpu_custom_call.1} parent=1 // pred_check
      _
    $region3: #{tpu_custom_call.1} parent=1 // pred_check_branch
      %15 = sbr.rel (0) target = $region5
    $region4: #{tpu_custom_call.1} parent=1 // pred_region
      %17 = vsyncadd [#allocation4], 0
      %s18 = sshll.u32 %s0, 4
      %s19 = int_to_ptr.hbm [resolvable:$true] %s18
      %s20 = sshll.u32 [#allocation3], 4
      %s21 = int_to_ptr.vmem [resolvable:$true] %s20
      %26 = dma.hbm_to_vmem [thread:$0]  %s19, 256, %s21, [#allocation4], 128, 128, 8
    $region5: #{tpu_custom_call.1} parent=1 // pred_fallthru
      _
    // Predicated region
    $region6: #{tpu_custom_call.1} parent=1 // pred_check
      _
    $region7: #{tpu_custom_call.1} parent=1 // pred_check_branch
      %28 = sbr.rel (0) target = $region9
    $region8: #{tpu_custom_call.1} parent=1 // pred_region
      %30 = vsyncadd [#allocation7], 0
      %s31 = sshll.u32 %s1, 4
      %s32 = int_to_ptr.hbm [resolvable:$true] %s31
      %s33 = sshll.u32 [#allocation6], 4
      %s34 = int_to_ptr.vmem [resolvable:$true] %s33
      %39 = dma.hbm_to_vmem [thread:$0]  %s32, 256, %s34, [#allocation7], 128, 128, 8
    $region9: #{tpu_custom_call.1} parent=1 // pred_fallthru
      _
    // Predicated region
    $region10: #{tpu_custom_call.1} parent=1 // pred_check
      _
    $region11: #{tpu_custom_call.1} parent=1 // pred_check_branch
      %41 = sbr.rel (0) target = $region13
    $region12: #{tpu_custom_call.1} parent=1 // pred_region
      %43 = vsyncadd [#allocation7], 0
      %s44 = sshll.u32 %s2, 4
      %s45 = int_to_ptr.hbm [resolvable:$true] %s44
      %s46 = sshll.u32 [#allocation8], 4
      %s47 = int_to_ptr.vmem [resolvable:$true] %s46
      %52 = dma.hbm_to_vmem [thread:$0]  %s45, 256, %s47, [#allocation7], 128, 128, 8
    $region13: #{tpu_custom_call.1} parent=1 // pred_fallthru
      _
    // Predicated region
    $region14: #{tpu_custom_call.1} parent=1 // pred_check
      _
    $region15: #{tpu_custom_call.1} parent=1 // pred_check_branch
      %54 = sbr.rel (0) target = $region17
    $region16: #{tpu_custom_call.1} parent=1 // pred_region
      _
    $region17: #{tpu_custom_call.1} parent=1 // pred_fallthru
      _
    // Predicated region
    $region18: #{tpu_custom_call.1} parent=1 // pred_check
      _
    $region19: #{tpu_custom_call.1} parent=1 // pred_check_branch
      %56 = sbr.rel (0) target = $region21
    $region20: #{tpu_custom_call.1} parent=1 // pred_region
      _
    $region21: #{tpu_custom_call.1} parent=1 // pred_fallthru
      _
    // Predicated region
    $region22: #{tpu_custom_call.1} parent=1 // pred_check
      _
    $region23: #{tpu_custom_call.1} parent=1 // pred_check_branch
      %58 = sbr.rel (0) target = $region25
    $region24: #{tpu_custom_call.1} parent=1 // pred_region
      _
    $region25: #{tpu_custom_call.1} parent=1 // pred_fallthru
      _
    // Predicated region
    $region26: #{tpu_custom_call.1} parent=1 // pred_check
      _
    $region27: #{tpu_custom_call.1} parent=1 // pred_check_branch
      %60 = sbr.rel (0) target = $region29
    $region28: #{tpu_custom_call.1} parent=1 // pred_region
      %62 = dma.done [#allocation4], 256
    $region29: #{tpu_custom_call.1} parent=1 // pred_fallthru
      _
    // Predicated region
    $region30: #{tpu_custom_call.1} parent=1 // pred_check
      _
    $region31: #{tpu_custom_call.1} parent=1 // pred_check_branch
      %64 = sbr.rel (0) target = $region33
    $region32: #{tpu_custom_call.1} parent=1 // pred_region
      %66 = dma.done [#allocation7], 256
    $region33: #{tpu_custom_call.1} parent=1 // pred_fallthru
      _
    // Predicated region
    $region34: #{tpu_custom_call.1} parent=1 // pred_check
      _
    $region35: #{tpu_custom_call.1} parent=1 // pred_check_branch
      %68 = sbr.rel (0) target = $region37
    $region36: #{tpu_custom_call.1} parent=1 // pred_region
      %70 = dma.done [#allocation7], 256
    $region37: #{tpu_custom_call.1} parent=1 // pred_fallthru
      _
    %p71 = scmp.eq.s32.totalorder 0, 0
    // Predicated region
    $region38: #{tpu_custom_call.1} parent=1 // pred_check
      %p72 = pneg %p71
    $region39: #{tpu_custom_call.1} parent=1 // pred_check_branch
      %74 = sbr.rel (%p72) target = $region41
    $region40: #{tpu_custom_call.1} parent=1 // pred_region
      %v75 = vld [vmem:[#allocation3] sm:$0xff]
      %v76 = vld [vmem:[#allocation3 + $0x8] sm:$0xff]
      %v77 = vld [vmem:[%s3] sm:$0xff]
      %v78 = vld [vmem:[%s3 + $0x8] sm:$0xff]
      %v79 = vld [vmem:[%s3 + $0x10] sm:$0xff]
      %v80 = vld [vmem:[%s3 + $0x18] sm:$0xff]
      %vm81 = vcmask 261120
      %v83 = vsel %vm81, %v75, 0
      %v86 = vsel %vm81, %v76, 0
      %88 = vmatpush.msra.mxu0 0.0
      %89 = vmatpush.msra.mxu0 0.0
      %90 = vmatpush.msra.mxu0 0.0
      %91 = vmatpush.msra.mxu0 0.0
      %92 = vmatpush.msra.mxu0 0.0
      %93 = vmatpush.msra.mxu0 0.0
      %94 = vmatpush.msra.mxu0 0.0
      %95 = vmatpush.msra.mxu0 0.0
      %96 = vmatpush.msra.mxu0 0.0
      %97 = vmatpush.msra.mxu0 0.0
      %98 = vmatpush.msra.mxu0 0.0
      %99 = vmatpush.msra.mxu0 0.0
      %100 = vmatpush.msra.mxu0 %v80
      %101 = vmatpush.msra.mxu0 %v79
      %102 = vmatpush.msra.mxu0 %v78
      %103 = vmatpush.msra.mxu0 %v77
      %104 = vmatmul.f32.gmra.mxu0 %v83
      %v105 = vpop.f32.mrf.mxu0
      %v106 = vadd.f32 0.0, %v105
      %107 = vmatmul.f32.gmra.mxu0 %v86
      %v108 = vpop.f32.mrf.mxu0
      %v109 = vadd.f32 0.0, %v108
      %110 = vdwg.mxu0
      %v111 = vld [vmem:[#allocation6] sm:$0xff]
      %v112 = vld [vmem:[#allocation6 + $0x8] sm:$0xff]
      %v113 = vld [vmem:[%s5] sm:$0xff]
      %v114 = vld [vmem:[%s5 + $0x8] sm:$0xff]
      %v115 = vld [vmem:[%s5 + $0x10] sm:$0xff]
      %v116 = vld [vmem:[%s5 + $0x18] sm:$0xff]
      %v117 = vld [vmem:[%s5 + $0x20] sm:$0xff]
      %v118 = vld [vmem:[%s5 + $0x28] sm:$0xff]
      %v119 = vld [vmem:[%s5 + $0x30] sm:$0xff]
      %v120 = vld [vmem:[%s5 + $0x38] sm:$0xff]
      %v121 = vld [vmem:[%s5 + $0x40] sm:$0xff]
      %v122 = vld [vmem:[%s5 + $0x48] sm:$0xff]
      %v123 = vld [vmem:[%s5 + $0x50] sm:$0xff]
      %v124 = vld [vmem:[%s5 + $0x58] sm:$0xff]
      %v125 = vld [vmem:[%s5 + $0x60] sm:$0xff]
      %v126 = vld [vmem:[%s5 + $0x68] sm:$0xff]
      %v127 = vld [vmem:[%s5 + $0x70] sm:$0xff]
      %v128 = vld [vmem:[%s5 + $0x78] sm:$0xff]
      %129 = vmatpush.msra.mxu0 %v128
      %130 = vmatpush.msra.mxu0 %v127
      %131 = vmatpush.msra.mxu0 %v126
      %132 = vmatpush.msra.mxu0 %v125
      %133 = vmatpush.msra.mxu0 %v124
      %134 = vmatpush.msra.mxu0 %v123
      %135 = vmatpush.msra.mxu0 %v122
      %136 = vmatpush.msra.mxu0 %v121
      %137 = vmatpush.msra.mxu0 %v120
      %138 = vmatpush.msra.mxu0 %v119
      %139 = vmatpush.msra.mxu0 %v118
      %140 = vmatpush.msra.mxu0 %v117
      %141 = vmatpush.msra.mxu0 %v116
      %142 = vmatpush.msra.mxu0 %v115
      %143 = vmatpush.msra.mxu0 %v114
      %144 = vmatpush.msra.mxu0 %v113
      %145 = vmatmul.f32.gmra.mxu0 %v111
      %v146 = vpop.f32.mrf.mxu0
      %v147 = vadd.f32 0.0, %v146
      %148 = vmatmul.f32.gmra.mxu0 %v112
      %v149 = vpop.f32.mrf.mxu0
      %v150 = vadd.f32 0.0, %v149
      %151 = vdwg.mxu0
      %v152 = vmul.f32 %v106, %v147
      %v153 = vmul.f32 %v109, %v150
      %154 = vst [vmem:[#allocation2] sm:$0xff] %v152
      %155 = vst [vmem:[#allocation2 + $0x8] sm:$0xff] %v153
    $region41: #{tpu_custom_call.1} parent=1 // pred_fallthru
      _
    %v156 = vld [vmem:[#allocation2] sm:$0xff]
    %v157 = vld [vmem:[#allocation2 + $0x8] sm:$0xff]
    %v158 = vld [vmem:[%s4] sm:$0xff]
    %v159 = vld [vmem:[%s4 + $0x8] sm:$0xff]
    %v160 = vld [vmem:[%s4 + $0x10] sm:$0xff]
    %v161 = vld [vmem:[%s4 + $0x18] sm:$0xff]
    %v162 = vld [vmem:[%s4 + $0x20] sm:$0xff]
    %v163 = vld [vmem:[%s4 + $0x28] sm:$0xff]
    %v164 = vld [vmem:[%s4 + $0x30] sm:$0xff]
    %v165 = vld [vmem:[%s4 + $0x38] sm:$0xff]
    %v166 = vld [vmem:[%s4 + $0x40] sm:$0xff]
    %v167 = vld [vmem:[%s4 + $0x48] sm:$0xff]
    %v168 = vld [vmem:[%s4 + $0x50] sm:$0xff]
    %v169 = vld [vmem:[%s4 + $0x58] sm:$0xff]
    %v170 = vld [vmem:[%s4 + $0x60] sm:$0xff]
    %v171 = vld [vmem:[%s4 + $0x68] sm:$0xff]
    %v172 = vld [vmem:[%s4 + $0x70] sm:$0xff]
    %v173 = vld [vmem:[%s4 + $0x78] sm:$0xff]
    %174 = vmatpush.msra.mxu0 %v173
    %175 = vmatpush.msra.mxu0 %v172
    %176 = vmatpush.msra.mxu0 %v171
    %177 = vmatpush.msra.mxu0 %v170
    %178 = vmatpush.msra.mxu0 %v169
    %179 = vmatpush.msra.mxu0 %v168
    %180 = vmatpush.msra.mxu0 %v167
    %181 = vmatpush.msra.mxu0 %v166
    %182 = vmatpush.msra.mxu0 %v165
    %183 = vmatpush.msra.mxu0 %v164
    %184 = vmatpush.msra.mxu0 %v163
    %185 = vmatpush.msra.mxu0 %v162
    %186 = vmatpush.msra.mxu0 %v161
    %187 = vmatpush.msra.mxu0 %v160
    %188 = vmatpush.msra.mxu0 %v159
    %189 = vmatpush.msra.mxu0 %v158
    %190 = vmatmul.f32.gmra.mxu0 %v156
    %v191 = vpop.f32.mrf.mxu0
    %v192 = vadd.f32 0.0, %v191
    %193 = vmatmul.f32.gmra.mxu0 %v157
    %v194 = vpop.f32.mrf.mxu0
    %v195 = vadd.f32 0.0, %v194
    %196 = vdwg.mxu0
    %v197 = vmul.f32 %v192, 5.656854
    %v198 = vmul.f32 %v195, 5.656854
    %v199 = vld [vmem:[#allocation8] sm:$0xff]
    %v200 = vld [vmem:[#allocation8 + $0x8] sm:$0xff]
    %v201 = vadd.f32 %v197, %v199
    %v202 = vadd.f32 %v198, %v200
    %vm203 = vcmask 261120
    %204 = vst.msk [vmem:[#allocation9] sm:$0xff] %vm203, %v201
    %205 = vst.msk [vmem:[#allocation9 + $0x8] sm:$0xff] %vm203, %v202
    // Predicated region
    $region42: #{tpu_custom_call.1} parent=1 // pred_check
      _
    $region43: #{tpu_custom_call.1} parent=1 // pred_check_branch
      %207 = sbr.rel (0) target = $region45
    $region44: #{tpu_custom_call.1} parent=1 // pred_region
      %209 = vsyncadd [#allocation5], 0
      %s210 = sshll.u32 [#allocation9], 4
      %s211 = int_to_ptr.vmem [resolvable:$true] %s210
      %s212 = sshll.u32 %s6, 4
      %s213 = int_to_ptr.hbm [resolvable:$true] %s212
      %218 = dma.vmem_to_hbm [thread:$0]  %s211, 256, %s213, [#allocation5], 128, 128, 8
    $region45: #{tpu_custom_call.1} parent=1 // pred_fallthru
      _
    // Predicated region
    $region46: #{tpu_custom_call.1} parent=1 // pred_check
      _
    $region47: #{tpu_custom_call.1} parent=1 // pred_check_branch
      %220 = sbr.rel (0) target = $region49
    $region48: #{tpu_custom_call.1} parent=1 // pred_region
      %222 = dma.done [#allocation5], 256
    $region49: #{tpu_custom_call.1} parent=1 // pred_fallthru
      _
    %223 = vsyncpa [#allocation4], 1
    %224 = vsyncpa [#allocation7], 1
    %225 = vsyncpa [#allocation5], 1

</llo_original>
